<compile_context>
chip_gen: v6e
topology: v6e:2x2x1
jax: 0.10.0
libtpu: 0.0.40
codegen_flags: <defaults>
</compile_context>

<pallas_src>
import math
import functools

import jax
import jax.numpy as jnp
from jax import lax
from jax.experimental import pallas as pl
from jax.experimental.pallas import tpu as pltpu

NEG_INF = -1e30  # finite "minus infinity" (safe under exp / max arithmetic)

# TODO(synk): per-chip tune (raise toward ~128 MiB on v5e/v6e, keep <=56 MiB on
# v7x whose physical VMEM per TensorCore is 64 MiB).
VMEM_LIMIT_BYTES = 48 * 1024 * 1024


def _pick_tile(t, candidates):
    """Largest candidate that evenly divides t, else the full extent t."""
    for c in candidates:
        if c <= t and t % c == 0:
            return c
    return t


# ----------------------------------------------------------------------------
# Kernel 1: QKV projection, N-tiled weights, head-major outputs
# ----------------------------------------------------------------------------
def _qkv_proj_kernel(x_ref, wq_ref, wk_ref, wv_ref, bq_ref, bk_ref, bv_ref,
                     q_ref, k_ref, v_ref, *, head_dim):
    # x_ref: [1, TT, H]; w*_ref: [H, TN]; b*_ref: [1, TN]
    # q/k/v_ref: [1, TN//head_dim, TT, head_dim]  (head-major layout)
    x = x_ref[0]
    heads_per_tile = q_ref.shape[1]

    def proj(w_ref, b_ref, o_ref):
        y = jnp.dot(x, w_ref[...], preferred_element_type=jnp.float32)
        y = (y + b_ref[...].astype(jnp.float32)).astype(o_ref.dtype)
        # Split the column tile into per-head [TT, d] slabs once here (amortized)
        # so the attention kernel never has to relayout per KV step.
        for h in range(heads_per_tile):
            o_ref[0, h] = y[:, h * head_dim:(h + 1) * head_dim]

    proj(wq_ref, bq_ref, q_ref)
    proj(wk_ref, bk_ref, k_ref)
    proj(wv_ref, bv_ref, v_ref)
    # TODO(synk): for very large H, add a K grid axis with an f32 accumulator
    # so the x block is also tiled along the contraction dimension.


# ----------------------------------------------------------------------------
# Kernel 2: flash-style causal attention over a lower-triangle step grid
# ----------------------------------------------------------------------------
def _flash_attn_kernel(qi_ref, ki_ref, last_ref, q_ref, k_ref, v_ref, mask_ref,
                       o_ref, m_sc, l_sc, acc_sc, *, head_dim, tq, tk):
    # scalar prefetch: qi_ref/ki_ref/last_ref: [steps] int32 (SMEM)
    # q_ref: [1, nh, TQ, d]; k_ref/v_ref: [1, nh, TK, d]; mask_ref: [1, 1, TK]
    # o_ref: [1, TQ, H]
    # m_sc/l_sc: [nh, TQ, 1] f32; acc_sc: [nh, TQ, d] f32
    step = pl.program_id(1)
    qi = qi_ref[step]
    ki = ki_ref[step]

    @pl.when(ki == 0)
    def _init():
        m_sc[...] = jnp.full_like(m_sc, NEG_INF)
        l_sc[...] = jnp.zeros_like(l_sc)
        acc_sc[...] = jnp.zeros_like(acc_sc)

    q = q_ref[0]                                  # [nh, TQ, d] (already scaled)
    k = k_ref[0]                                  # [nh, TK, d]
    v = v_ref[0]                                  # [nh, TK, d]
    amask = mask_ref[0].astype(jnp.float32)       # [1, TK] -> bcast over queries

    # Per-tile causal bias + external attention mask (shared by all heads).
    q_start = qi * tq
    k_start = ki * tk
    rows = q_start + lax.broadcasted_iota(jnp.int32, (tq, tk), 0)
    cols = k_start + lax.broadcasted_iota(jnp.int32, (tq, tk), 1)
    bias = jnp.where(cols <= rows, 0.0, NEG_INF).astype(jnp.float32) + amask

    # Head-batched score matmul (single MXU stream instead of per-head dots).
    # TODO(synk): for very large num_heads, move heads onto a grid axis to
    # bound the [nh, TQ, TK] intermediate / vreg pressure.
    s = jnp.einsum('hqd,hkd->hqk', q, k, preferred_element_type=jnp.float32)
    s = s + bias[None, :, :]                      # [nh, TQ, TK]

    m_prev = m_sc[...]                            # [nh, TQ, 1]
    m_new = jnp.maximum(m_prev, jnp.max(s, axis=-1, keepdims=True))
    alpha = jnp.exp(m_prev - m_new)
    # TODO(synk): on v6e/v7x compute exp in bf16 and fold the row-sum into the
    # PV matmul (ones column); keep f32 on v5e (no bf16 VPU/EUP).
    p = jnp.exp(s - m_new)
    l_sc[...] = alpha * l_sc[...] + jnp.sum(p, axis=-1, keepdims=True)
    acc_sc[...] = alpha * acc_sc[...] + jnp.einsum(
        'hqk,hkd->hqd', p.astype(v.dtype), v, preferred_element_type=jnp.float32)
    m_sc[...] = m_new

    @pl.when(last_ref[step] == 1)
    def _finalize():
        num_heads = acc_sc.shape[0]
        # Exact division: finalize runs once per Q tile, so this is essentially
        # free and avoids the approximate-reciprocal error.
        norm = acc_sc[...] / l_sc[...]            # [nh, TQ, d], single bcast mul
        # Merge heads back into a [TQ, H] row-major output.
        # TODO(synk): when H % 128 == 0, a single transpose+reshape store would
        # be fully lane-dense; the per-head store here is once-per-tile only.
        for h in range(num_heads):
            o_ref[0, :, h * head_dim:(h + 1) * head_dim] = norm[h].astype(o_ref.dtype)


# ----------------------------------------------------------------------------
# Wrapper
# ----------------------------------------------------------------------------
def causal_self_attention(hidden_states, attention_mask, params, num_heads,
                          *, tq=None, tk=None):
    """hidden_states: [B, T, H]; attention_mask: [B, 1, 1, T] (additive).
    Returns [B, T, H] in hidden_states.dtype (all accumulation in f32)."""
    B, T, H = hidden_states.shape
    assert H % num_heads == 0
    head_dim = H // num_heads
    dtype = hidden_states.dtype
    # TODO(synk): on v5e, cast q/k/v (and p) to bf16 to halve HBM traffic and
    # double MXU throughput when the caller passes f32 activations.

    # Attention tiles: 256 where it divides T (fills the 2x256 MXU on v6e/v7x),
    # else 128, else the full (small) T.
    if tq is None:
        tq = _pick_tile(T, (256, 128))
    if tk is None:
        tk = tq
    # Projection tiles are decoupled from the attention tiles.
    tt = _pick_tile(T, (512, 256, 128, 64, 32, 16, 8))
    tn_candidates = tuple(c for c in (512, 256, 128) if c % head_dim == 0)
    tn = _pick_tile(H, tn_candidates)
    heads_per_tile = tn // head_dim

    # Fold 1/sqrt(d) into Wq/bq so the attention kernel does no per-score scaling.
    scale = 1.0 / math.sqrt(head_dim)
    wq = (params["wq"] * scale).astype(dtype)
    bq = (params["bq"] * scale).reshape(1, H).astype(dtype)
    wk = params["wk"].astype(dtype)
    bk = params["bk"].reshape(1, H).astype(dtype)
    wv = params["wv"].astype(dtype)
    bv = params["bv"].reshape(1, H).astype(dtype)

    mask = attention_mask.reshape(B, 1, T).astype(jnp.float32)

    # --- Kernel 1: QKV projection (weights streamed in [H, tn] tiles) --------
    q, k, v = pl.pallas_call(
        functools.partial(_qkv_proj_kernel, head_dim=head_dim),
        out_shape=tuple(
            jax.ShapeDtypeStruct((B, num_heads, T, head_dim), dtype)
            for _ in range(3)),
        grid=(B, T // tt, H // tn),
        in_specs=[
            pl.BlockSpec((1, tt, H), lambda b, t, j: (b, t, 0)),   # x
            pl.BlockSpec((H, tn), lambda b, t, j: (0, j)),         # Wq (scaled)
            pl.BlockSpec((H, tn), lambda b, t, j: (0, j)),         # Wk
            pl.BlockSpec((H, tn), lambda b, t, j: (0, j)),         # Wv
            pl.BlockSpec((1, tn), lambda b, t, j: (0, j)),         # bq (scaled)
            pl.BlockSpec((1, tn), lambda b, t, j: (0, j)),         # bk
            pl.BlockSpec((1, tn), lambda b, t, j: (0, j)),         # bv
        ],
        out_specs=tuple(
            pl.BlockSpec((1, heads_per_tile, tt, head_dim),
                         lambda b, t, j: (b, j, t, 0))
            for _ in range(3)),
        compiler_params=pltpu.CompilerParams(
            dimension_semantics=("parallel", "parallel", "parallel"),
            vmem_limit_bytes=VMEM_LIMIT_BYTES),
    )(hidden_states, wq, wk, wv, bq, bk, bv)

    # --- Lower-triangle step tables (scalar-prefetched) -----------------------
    # Only (qi, ki) pairs that intersect the causal lower triangle are visited,
    # so fully-masked K/V tiles are never DMA'd.
    nq, nk = T // tq, T // tk
    qi_l, ki_l, last_l = [], [], []
    for qi_idx in range(nq):
        kmax = min(nk, pl.cdiv((qi_idx + 1) * tq, tk))
        for ki_idx in range(kmax):
            qi_l.append(qi_idx)
            ki_l.append(ki_idx)
            last_l.append(1 if ki_idx == kmax - 1 else 0)
    steps = len(qi_l)
    qi_map = jnp.asarray(qi_l, dtype=jnp.int32)
    ki_map = jnp.asarray(ki_l, dtype=jnp.int32)
    last_map = jnp.asarray(last_l, dtype=jnp.int32)

    # --- Kernel 2: flash attention --------------------------------------------
    # TODO(synk): on v7x, mark the batch axis pltpu.CORE_PARALLEL (2 TCs/chip);
    # consider pipeline_mode=pl.Buffered(3) on the K/V specs for small tiles.
    kernel = functools.partial(_flash_attn_kernel, head_dim=head_dim, tq=tq, tk=tk)
    out = pl.pallas_call(
        kernel,
        out_shape=jax.ShapeDtypeStruct((B, T, H), dtype),
        grid_spec=pltpu.PrefetchScalarGridSpec(
            num_scalar_prefetch=3,
            grid=(B, steps),
            in_specs=[
                pl.BlockSpec((1, num_heads, tq, head_dim),
                             lambda b, s, qi, ki, lst: (b, 0, qi[s], 0)),   # q
                pl.BlockSpec((1, num_heads, tk, head_dim),
                             lambda b, s, qi, ki, lst: (b, 0, ki[s], 0)),   # k
                pl.BlockSpec((1, num_heads, tk, head_dim),
                             lambda b, s, qi, ki, lst: (b, 0, ki[s], 0)),   # v
                pl.BlockSpec((1, 1, tk),
                             lambda b, s, qi, ki, lst: (b, 0, ki[s])),      # mask
            ],
            out_specs=pl.BlockSpec((1, tq, H),
                                   lambda b, s, qi, ki, lst: (b, qi[s], 0)),
            scratch_shapes=[
                pltpu.VMEM((num_heads, tq, 1), jnp.float32),          # running max
                pltpu.VMEM((num_heads, tq, 1), jnp.float32),          # running denom
                pltpu.VMEM((num_heads, tq, head_dim), jnp.float32),   # accumulator
            ]),
        compiler_params=pltpu.CompilerParams(
            dimension_semantics=("parallel", "arbitrary"),
            vmem_limit_bytes=VMEM_LIMIT_BYTES),
    )(qi_map, ki_map, last_map, q, k, v, mask)
    return out


# ----------------------------------------------------------------------------
# Pure-JAX reference mirroring the PyTorch forward
# ----------------------------------------------------------------------------
def _reference(hidden_states, attention_mask, params, num_heads):
    B, T, H = hidden_states.shape
    d = H // num_heads

    def proj(w, b):
        y = hidden_states @ w + b                                   # [B, T, H]
        return y.reshape(B, T, num_heads, d).transpose(0, 2, 1, 3)  # [B, h, T, d]

    q = proj(params["wq"], params["bq"])
    k = proj(params["wk"], params["bk"])
    v = proj(params["wv"], params["bv"])

    s = jnp.einsum("bhtd,bhsd->bhts", q, k) / math.sqrt(d)
    causal = jnp.where(jnp.triu(jnp.ones((T, T)), 1) == 1, -jnp.inf, 0.0)
    s = s + causal + attention_mask                                 # [B,1,1,T] bcast
    p = jax.nn.softmax(s, axis=-1)
    o = jnp.einsum("bhts,bhsd->bhtd", p, v)
    return o.transpose(0, 2, 1, 3).reshape(B, T, H)


if __name__ == "__main__":
    B, T, H, num_heads = 2, 8, 32, 4

    key = jax.random.PRNGKey(0)
    kx, kq, kbq, kk, kbk, kv, kbv, km = jax.random.split(key, 8)

    x = jax.random.normal(kx, (B, T, H), dtype=jnp.float32)

    scale = 1.0 / math.sqrt(H)
    params = {
        "wq": jax.random.normal(kq, (H, H), dtype=jnp.float32) * scale,
        "bq": jax.random.normal(kbq, (H,), dtype=jnp.float32) * 0.1,
        "wk": jax.random.normal(kk, (H, H), dtype=jnp.float32) * scale,
        "bk": jax.random.normal(kbk, (H,), dtype=jnp.float32) * 0.1,
        "wv": jax.random.normal(kv, (H, H), dtype=jnp.float32) * scale,
        "bv": jax.random.normal(kbv, (H,), dtype=jnp.float32) * 0.1,
    }

    # Additive attention mask [B, 1, 1, T]: randomly mask some key positions.
    key_keep = jax.random.bernoulli(km, 0.75, (B, 1, 1, T))
    attention_mask = jnp.where(key_keep, 0.0, -10000.0).astype(jnp.float32)

    out = causal_self_attention(x, attention_mask, params, num_heads)
    out = jax.block_until_ready(out)

    ref = _reference(x, attention_mask, params, num_heads)
    assert out.shape == (B, T, H)
    assert jnp.allclose(out, ref, atol=2e-3, rtol=2e-3), "mismatch vs reference"

    print("KERNEL_OK")
</pallas_src>

<mosaic_0001>
module attributes {stable_mosaic.version = 11 : i64} {
  func.func @_qkv_proj_kernel(%arg0: i32, %arg1: i32, %arg2: i32, %arg3: memref<1x8x32xf32, #tpu.memory_space<vmem>>, %arg4: memref<32x32xf32, #tpu.memory_space<vmem>>, %arg5: memref<32x32xf32, #tpu.memory_space<vmem>>, %arg6: memref<32x32xf32, #tpu.memory_space<vmem>>, %arg7: memref<1x32xf32, #tpu.memory_space<vmem>>, %arg8: memref<1x32xf32, #tpu.memory_space<vmem>>, %arg9: memref<1x32xf32, #tpu.memory_space<vmem>>, %arg10: memref<1x4x8x8xf32, #tpu.memory_space<vmem>>, %arg11: memref<1x4x8x8xf32, #tpu.memory_space<vmem>>, %arg12: memref<1x4x8x8xf32, #tpu.memory_space<vmem>>) attributes {dimension_semantics = [#tpu.dimension_semantics<parallel>, #tpu.dimension_semantics<parallel>, #tpu.dimension_semantics<parallel>], iteration_bounds = array<i64: 2, 1, 1>, scalar_prefetch = 0 : i64, scratch_operands = 0 : i64, tpu.core_type = #tpu.core_type<tc>, window_params = [{transform_indices = @transform_0, window_bounds = array<i64: 1, 8, 32>}, {transform_indices = @transform_1, window_bounds = array<i64: 32, 32>}, {transform_indices = @transform_2, window_bounds = array<i64: 32, 32>}, {transform_indices = @transform_3, window_bounds = array<i64: 32, 32>}, {transform_indices = @transform_4, window_bounds = array<i64: 1, 32>}, {transform_indices = @transform_5, window_bounds = array<i64: 1, 32>}, {transform_indices = @transform_6, window_bounds = array<i64: 1, 32>}, {transform_indices = @transform_7, window_bounds = array<i64: 1, 4, 8, 8>}, {transform_indices = @transform_8, window_bounds = array<i64: 1, 4, 8, 8>}, {transform_indices = @transform_9, window_bounds = array<i64: 1, 4, 8, 8>}]} {
    %c0 = arith.constant 0 : index
    %c0_0 = arith.constant 0 : index
    %c0_1 = arith.constant 0 : index
    %0 = vector.load %arg3[%c0, %c0_0, %c0_1] : memref<1x8x32xf32, #tpu.memory_space<vmem>>, vector<1x8x32xf32>
    %1 = vector.shape_cast %0 : vector<1x8x32xf32> to vector<8x32xf32>
    %c0_2 = arith.constant 0 : index
    %c0_3 = arith.constant 0 : index
    %2 = vector.load %arg4[%c0_2, %c0_3] : memref<32x32xf32, #tpu.memory_space<vmem>>, vector<32x32xf32>
    %cst = arith.constant dense<0.000000e+00> : vector<8x32xf32>
    %3 = tpu.matmul %1, %2, %cst {dimension_numbers = #tpu.dot_dimension_numbers<[1], [0], [0], [1], [0, 0, 1, 1], [], []>} : vector<8x32xf32>, vector<32x32xf32>, vector<8x32xf32> -> vector<8x32xf32>
    %c0_4 = arith.constant 0 : index
    %c0_5 = arith.constant 0 : index
    %4 = vector.load %arg7[%c0_4, %c0_5] : memref<1x32xf32, #tpu.memory_space<vmem>>, vector<1x32xf32>
    %5 = vector.broadcast %4 : vector<1x32xf32> to vector<8x32xf32>
    %6 = arith.addf %3, %5 : vector<8x32xf32>
    %7 = vector.extract_strided_slice %6 {offsets = [0, 0], sizes = [8, 8], strides = [1, 1]} : vector<8x32xf32> to vector<8x8xf32>
    %c0_6 = arith.constant 0 : index
    %c0_7 = arith.constant 0 : index
    %c0_8 = arith.constant 0 : index
    %c0_9 = arith.constant 0 : index
    %8 = vector.load %arg10[%c0_6, %c0_7, %c0_8, %c0_9] : memref<1x4x8x8xf32, #tpu.memory_space<vmem>>, vector<1x1x8x8xf32>
    %9 = vector.shape_cast %8 : vector<1x1x8x8xf32> to vector<8x8xf32>
    %10 = vector.shape_cast %7 : vector<8x8xf32> to vector<1x1x8x8xf32>
    tpu.vector_store %arg10[%c0_6, %c0_7, %c0_8, %c0_9], %10 {strides = array<i32>} : memref<1x4x8x8xf32, #tpu.memory_space<vmem>>, vector<1x1x8x8xf32>,
    %11 = vector.extract_strided_slice %6 {offsets = [0, 8], sizes = [8, 8], strides = [1, 1]} : vector<8x32xf32> to vector<8x8xf32>
    %c0_10 = arith.constant 0 : index
    %c1 = arith.constant 1 : index
    %c0_11 = arith.constant 0 : index
    %c0_12 = arith.constant 0 : index
    %12 = vector.load %arg10[%c0_10, %c1, %c0_11, %c0_12] : memref<1x4x8x8xf32, #tpu.memory_space<vmem>>, vector<1x1x8x8xf32>
    %13 = vector.shape_cast %12 : vector<1x1x8x8xf32> to vector<8x8xf32>
    %14 = vector.shape_cast %11 : vector<8x8xf32> to vector<1x1x8x8xf32>
    tpu.vector_store %arg10[%c0_10, %c1, %c0_11, %c0_12], %14 {strides = array<i32>} : memref<1x4x8x8xf32, #tpu.memory_space<vmem>>, vector<1x1x8x8xf32>,
    %15 = vector.extract_strided_slice %6 {offsets = [0, 16], sizes = [8, 8], strides = [1, 1]} : vector<8x32xf32> to vector<8x8xf32>
    %c0_13 = arith.constant 0 : index
    %c2 = arith.constant 2 : index
    %c0_14 = arith.constant 0 : index
    %c0_15 = arith.constant 0 : index
    %16 = vector.load %arg10[%c0_13, %c2, %c0_14, %c0_15] : memref<1x4x8x8xf32, #tpu.memory_space<vmem>>, vector<1x1x8x8xf32>
    %17 = vector.shape_cast %16 : vector<1x1x8x8xf32> to vector<8x8xf32>
    %18 = vector.shape_cast %15 : vector<8x8xf32> to vector<1x1x8x8xf32>
    tpu.vector_store %arg10[%c0_13, %c2, %c0_14, %c0_15], %18 {strides = array<i32>} : memref<1x4x8x8xf32, #tpu.memory_space<vmem>>, vector<1x1x8x8xf32>,
    %19 = vector.extract_strided_slice %6 {offsets = [0, 24], sizes = [8, 8], strides = [1, 1]} : vector<8x32xf32> to vector<8x8xf32>
    %c0_16 = arith.constant 0 : index
    %c3 = arith.constant 3 : index
    %c0_17 = arith.constant 0 : index
    %c0_18 = arith.constant 0 : index
    %20 = vector.load %arg10[%c0_16, %c3, %c0_17, %c0_18] : memref<1x4x8x8xf32, #tpu.memory_space<vmem>>, vector<1x1x8x8xf32>
    %21 = vector.shape_cast %20 : vector<1x1x8x8xf32> to vector<8x8xf32>
    %22 = vector.shape_cast %19 : vector<8x8xf32> to vector<1x1x8x8xf32>
    tpu.vector_store %arg10[%c0_16, %c3, %c0_17, %c0_18], %22 {strides = array<i32>} : memref<1x4x8x8xf32, #tpu.memory_space<vmem>>, vector<1x1x8x8xf32>,
    %c0_19 = arith.constant 0 : index
    %c0_20 = arith.constant 0 : index
    %23 = vector.load %arg5[%c0_19, %c0_20] : memref<32x32xf32, #tpu.memory_space<vmem>>, vector<32x32xf32>
    %cst_21 = arith.constant dense<0.000000e+00> : vector<8x32xf32>
    %24 = tpu.matmul %1, %23, %cst_21 {dimension_numbers = #tpu.dot_dimension_numbers<[1], [0], [0], [1], [0, 0, 1, 1], [], []>} : vector<8x32xf32>, vector<32x32xf32>, vector<8x32xf32> -> vector<8x32xf32>
    %c0_22 = arith.constant 0 : index
    %c0_23 = arith.constant 0 : index
    %25 = vector.load %arg8[%c0_22, %c0_23] : memref<1x32xf32, #tpu.memory_space<vmem>>, vector<1x32xf32>
    %26 = vector.broadcast %25 : vector<1x32xf32> to vector<8x32xf32>
    %27 = arith.addf %24, %26 : vector<8x32xf32>
    %28 = vector.extract_strided_slice %27 {offsets = [0, 0], sizes = [8, 8], strides = [1, 1]} : vector<8x32xf32> to vector<8x8xf32>
    %c0_24 = arith.constant 0 : index
    %c0_25 = arith.constant 0 : index
    %c0_26 = arith.constant 0 : index
    %c0_27 = arith.constant 0 : index
    %29 = vector.load %arg11[%c0_24, %c0_25, %c0_26, %c0_27] : memref<1x4x8x8xf32, #tpu.memory_space<vmem>>, vector<1x1x8x8xf32>
    %30 = vector.shape_cast %29 : vector<1x1x8x8xf32> to vector<8x8xf32>
    %31 = vector.shape_cast %28 : vector<8x8xf32> to vector<1x1x8x8xf32>
    tpu.vector_store %arg11[%c0_24, %c0_25, %c0_26, %c0_27], %31 {strides = array<i32>} : memref<1x4x8x8xf32, #tpu.memory_space<vmem>>, vector<1x1x8x8xf32>,
    %32 = vector.extract_strided_slice %27 {offsets = [0, 8], sizes = [8, 8], strides = [1, 1]} : vector<8x32xf32> to vector<8x8xf32>
    %c0_28 = arith.constant 0 : index
    %c1_29 = arith.constant 1 : index
    %c0_30 = arith.constant 0 : index
    %c0_31 = arith.constant 0 : index
    %33 = vector.load %arg11[%c0_28, %c1_29, %c0_30, %c0_31] : memref<1x4x8x8xf32, #tpu.memory_space<vmem>>, vector<1x1x8x8xf32>
    %34 = vector.shape_cast %33 : vector<1x1x8x8xf32> to vector<8x8xf32>
    %35 = vector.shape_cast %32 : vector<8x8xf32> to vector<1x1x8x8xf32>
    tpu.vector_store %arg11[%c0_28, %c1_29, %c0_30, %c0_31], %35 {strides = array<i32>} : memref<1x4x8x8xf32, #tpu.memory_space<vmem>>, vector<1x1x8x8xf32>,
    %36 = vector.extract_strided_slice %27 {offsets = [0, 16], sizes = [8, 8], strides = [1, 1]} : vector<8x32xf32> to vector<8x8xf32>
    %c0_32 = arith.constant 0 : index
    %c2_33 = arith.constant 2 : index
    %c0_34 = arith.constant 0 : index
    %c0_35 = arith.constant 0 : index
    %37 = vector.load %arg11[%c0_32, %c2_33, %c0_34, %c0_35] : memref<1x4x8x8xf32, #tpu.memory_space<vmem>>, vector<1x1x8x8xf32>
    %38 = vector.shape_cast %37 : vector<1x1x8x8xf32> to vector<8x8xf32>
    %39 = vector.shape_cast %36 : vector<8x8xf32> to vector<1x1x8x8xf32>
    tpu.vector_store %arg11[%c0_32, %c2_33, %c0_34, %c0_35], %39 {strides = array<i32>} : memref<1x4x8x8xf32, #tpu.memory_space<vmem>>, vector<1x1x8x8xf32>,
    %40 = vector.extract_strided_slice %27 {offsets = [0, 24], sizes = [8, 8], strides = [1, 1]} : vector<8x32xf32> to vector<8x8xf32>
    %c0_36 = arith.constant 0 : index
    %c3_37 = arith.constant 3 : index
    %c0_38 = arith.constant 0 : index
    %c0_39 = arith.constant 0 : index
    %41 = vector.load %arg11[%c0_36, %c3_37, %c0_38, %c0_39] : memref<1x4x8x8xf32, #tpu.memory_space<vmem>>, vector<1x1x8x8xf32>
    %42 = vector.shape_cast %41 : vector<1x1x8x8xf32> to vector<8x8xf32>
    %43 = vector.shape_cast %40 : vector<8x8xf32> to vector<1x1x8x8xf32>
    tpu.vector_store %arg11[%c0_36, %c3_37, %c0_38, %c0_39], %43 {strides = array<i32>} : memref<1x4x8x8xf32, #tpu.memory_space<vmem>>, vector<1x1x8x8xf32>,
    %c0_40 = arith.constant 0 : index
    %c0_41 = arith.constant 0 : index
    %44 = vector.load %arg6[%c0_40, %c0_41] : memref<32x32xf32, #tpu.memory_space<vmem>>, vector<32x32xf32>
    %cst_42 = arith.constant dense<0.000000e+00> : vector<8x32xf32>
    %45 = tpu.matmul %1, %44, %cst_42 {dimension_numbers = #tpu.dot_dimension_numbers<[1], [0], [0], [1], [0, 0, 1, 1], [], []>} : vector<8x32xf32>, vector<32x32xf32>, vector<8x32xf32> -> vector<8x32xf32>
    %c0_43 = arith.constant 0 : index
    %c0_44 = arith.constant 0 : index
    %46 = vector.load %arg9[%c0_43, %c0_44] : memref<1x32xf32, #tpu.memory_space<vmem>>, vector<1x32xf32>
    %47 = vector.broadcast %46 : vector<1x32xf32> to vector<8x32xf32>
    %48 = arith.addf %45, %47 : vector<8x32xf32>
    %49 = vector.extract_strided_slice %48 {offsets = [0, 0], sizes = [8, 8], strides = [1, 1]} : vector<8x32xf32> to vector<8x8xf32>
    %c0_45 = arith.constant 0 : index
    %c0_46 = arith.constant 0 : index
    %c0_47 = arith.constant 0 : index
    %c0_48 = arith.constant 0 : index
    %50 = vector.load %arg12[%c0_45, %c0_46, %c0_47, %c0_48] : memref<1x4x8x8xf32, #tpu.memory_space<vmem>>, vector<1x1x8x8xf32>
    %51 = vector.shape_cast %50 : vector<1x1x8x8xf32> to vector<8x8xf32>
    %52 = vector.shape_cast %49 : vector<8x8xf32> to vector<1x1x8x8xf32>
    tpu.vector_store %arg12[%c0_45, %c0_46, %c0_47, %c0_48], %52 {strides = array<i32>} : memref<1x4x8x8xf32, #tpu.memory_space<vmem>>, vector<1x1x8x8xf32>,
    %53 = vector.extract_strided_slice %48 {offsets = [0, 8], sizes = [8, 8], strides = [1, 1]} : vector<8x32xf32> to vector<8x8xf32>
    %c0_49 = arith.constant 0 : index
    %c1_50 = arith.constant 1 : index
    %c0_51 = arith.constant 0 : index
    %c0_52 = arith.constant 0 : index
    %54 = vector.load %arg12[%c0_49, %c1_50, %c0_51, %c0_52] : memref<1x4x8x8xf32, #tpu.memory_space<vmem>>, vector<1x1x8x8xf32>
    %55 = vector.shape_cast %54 : vector<1x1x8x8xf32> to vector<8x8xf32>
    %56 = vector.shape_cast %53 : vector<8x8xf32> to vector<1x1x8x8xf32>
    tpu.vector_store %arg12[%c0_49, %c1_50, %c0_51, %c0_52], %56 {strides = array<i32>} : memref<1x4x8x8xf32, #tpu.memory_space<vmem>>, vector<1x1x8x8xf32>,
    %57 = vector.extract_strided_slice %48 {offsets = [0, 16], sizes = [8, 8], strides = [1, 1]} : vector<8x32xf32> to vector<8x8xf32>
    %c0_53 = arith.constant 0 : index
    %c2_54 = arith.constant 2 : index
    %c0_55 = arith.constant 0 : index
    %c0_56 = arith.constant 0 : index
    %58 = vector.load %arg12[%c0_53, %c2_54, %c0_55, %c0_56] : memref<1x4x8x8xf32, #tpu.memory_space<vmem>>, vector<1x1x8x8xf32>
    %59 = vector.shape_cast %58 : vector<1x1x8x8xf32> to vector<8x8xf32>
    %60 = vector.shape_cast %57 : vector<8x8xf32> to vector<1x1x8x8xf32>
    tpu.vector_store %arg12[%c0_53, %c2_54, %c0_55, %c0_56], %60 {strides = array<i32>} : memref<1x4x8x8xf32, #tpu.memory_space<vmem>>, vector<1x1x8x8xf32>,
    %61 = vector.extract_strided_slice %48 {offsets = [0, 24], sizes = [8, 8], strides = [1, 1]} : vector<8x32xf32> to vector<8x8xf32>
    %c0_57 = arith.constant 0 : index
    %c3_58 = arith.constant 3 : index
    %c0_59 = arith.constant 0 : index
    %c0_60 = arith.constant 0 : index
    %62 = vector.load %arg12[%c0_57, %c3_58, %c0_59, %c0_60] : memref<1x4x8x8xf32, #tpu.memory_space<vmem>>, vector<1x1x8x8xf32>
    %63 = vector.shape_cast %62 : vector<1x1x8x8xf32> to vector<8x8xf32>
    %64 = vector.shape_cast %61 : vector<8x8xf32> to vector<1x1x8x8xf32>
    tpu.vector_store %arg12[%c0_57, %c3_58, %c0_59, %c0_60], %64 {strides = array<i32>} : memref<1x4x8x8xf32, #tpu.memory_space<vmem>>, vector<1x1x8x8xf32>,
    return
  }
  func.func @transform_0(%arg0: i32, %arg1: i32, %arg2: i32) -> (i32, i32, i32) {
    %c0_i32 = arith.constant 0 : i32
    %c0_i32_0 = arith.constant 0 : i32
    return %arg0, %arg1, %c0_i32 : i32, i32, i32
  }
  func.func @transform_1(%arg0: i32, %arg1: i32, %arg2: i32) -> (i32, i32) {
    %c0_i32 = arith.constant 0 : i32
    %c0_i32_0 = arith.constant 0 : i32
    return %c0_i32, %arg2 : i32, i32
  }
  func.func @transform_2(%arg0: i32, %arg1: i32, %arg2: i32) -> (i32, i32) {
    %c0_i32 = arith.constant 0 : i32
    %c0_i32_0 = arith.constant 0 : i32
    return %c0_i32, %arg2 : i32, i32
  }
  func.func @transform_3(%arg0: i32, %arg1: i32, %arg2: i32) -> (i32, i32) {
    %c0_i32 = arith.constant 0 : i32
    %c0_i32_0 = arith.constant 0 : i32
    return %c0_i32, %arg2 : i32, i32
  }
  func.func @transform_4(%arg0: i32, %arg1: i32, %arg2: i32) -> (i32, i32) {
    %c0_i32 = arith.constant 0 : i32
    %c0_i32_0 = arith.constant 0 : i32
    return %c0_i32, %arg2 : i32, i32
  }
  func.func @transform_5(%arg0: i32, %arg1: i32, %arg2: i32) -> (i32, i32) {
    %c0_i32 = arith.constant 0 : i32
    %c0_i32_0 = arith.constant 0 : i32
    return %c0_i32, %arg2 : i32, i32
  }
  func.func @transform_6(%arg0: i32, %arg1: i32, %arg2: i32) -> (i32, i32) {
    %c0_i32 = arith.constant 0 : i32
    %c0_i32_0 = arith.constant 0 : i32
    return %c0_i32, %arg2 : i32, i32
  }
  func.func @transform_7(%arg0: i32, %arg1: i32, %arg2: i32) -> (i32, i32, i32, i32) {
    %c0_i32 = arith.constant 0 : i32
    %c0_i32_0 = arith.constant 0 : i32
    return %arg0, %arg2, %arg1, %c0_i32 : i32, i32, i32, i32
  }
  func.func @transform_8(%arg0: i32, %arg1: i32, %arg2: i32) -> (i32, i32, i32, i32) {
    %c0_i32 = arith.constant 0 : i32
    %c0_i32_0 = arith.constant 0 : i32
    return %arg0, %arg2, %arg1, %c0_i32 : i32, i32, i32, i32
  }
  func.func @transform_9(%arg0: i32, %arg1: i32, %arg2: i32) -> (i32, i32, i32, i32) {
    %c0_i32 = arith.constant 0 : i32
    %c0_i32_0 = arith.constant 0 : i32
    return %arg0, %arg2, %arg1, %c0_i32 : i32, i32, i32, i32
  }
}

</mosaic_0001>

<llo_original>
// kernel: tpu_custom_call.1
$region0: #{tpu_custom_call.1}
  #allocation0 [shape = 'u32[]', space=smem, size = 0x4, offset = 0x4, fixed_abs, tag = 'smem constant byte address 0x4 - core index']
  #allocation1 [shape = 'u32[144,128]{1,0:T(1,128)}', space=vmem, size = 0x12000, scoped, tag = 'internal scratch']
  %s0 = inlined_call_operand.hbm [shape: f32[2,8,32], index: 0, kind: input, shape index: {}]
  %s1 = inlined_call_operand.hbm [shape: f32[32,32], index: 1, kind: input, shape index: {}]
  %s2 = inlined_call_operand.hbm [shape: f32[32,32], index: 2, kind: input, shape index: {}]
  %s3 = inlined_call_operand.hbm [shape: f32[32,32], index: 3, kind: input, shape index: {}]
  %s4 = inlined_call_operand.vmem [shape: f32[1,32], index: 4, kind: input, shape index: {}]
  %s5 = inlined_call_operand.vmem [shape: f32[1,32], index: 5, kind: input, shape index: {}]
  %s6 = inlined_call_operand.vmem [shape: f32[1,32], index: 6, kind: input, shape index: {}]
  %s7 = inlined_call_operand.hbm [shape: f32[2,4,8,8], index: 7, kind: output, shape index: {0}]
  %s8 = inlined_call_operand.hbm [shape: f32[2,4,8,8], index: 8, kind: output, shape index: {1}]
  %s9 = inlined_call_operand.hbm [shape: f32[2,4,8,8], index: 9, kind: output, shape index: {2}]
  %10 = xla_tuple %s7, %s8, %s9
  %s11 = sld [smem:[#allocation0]]
  $region93: #{tpu_custom_call.1} parent=0
    _
  %s13 = ssub.s32 1, %s11
  %s14 = scalar_select 0, %s13, %s11
  $region1: #{tpu_custom_call.1} parent=0
    #allocation2 [shape = 'u8[8192]{0}', space=vmem, size = 0x2000, scoped, tag = 'input window, operand 0']
    #allocation3 [shape = 's32[2]{0}', space=sflag, size = 0x8, scoped, tag = 'scoped memory for tpu_custom_call.1']
    #allocation4 [shape = 's32[2]{0}', space=sflag, size = 0x8, scoped, tag = 'scoped memory for tpu_custom_call.1']
    #allocation5 [shape = 'u8[16384]{0}', space=vmem, size = 0x4000, scoped, tag = 'input window, operand 1, single buffered']
    #allocation6 [shape = 's32[1]{0}', space=sflag, size = 0x4, scoped, tag = 'scoped memory for tpu_custom_call.1']
    #allocation7 [shape = 'u8[16384]{0}', space=vmem, size = 0x4000, scoped, tag = 'input window, operand 2, single buffered']
    #allocation8 [shape = 'u8[16384]{0}', space=vmem, size = 0x4000, scoped, tag = 'input window, operand 3, single buffered']
    #allocation9 [shape = 's32[1]{0}', space=sflag, size = 0x4, scoped, tag = 'scoped memory for tpu_custom_call.1']
    #allocation10 [shape = 'u8[32768]{0}', space=vmem, size = 0x8000, scoped, tag = 'output window, operand 0']
    #allocation11 [shape = 'u8[32768]{0}', space=vmem, size = 0x8000, scoped, tag = 'output window, operand 1']
    #allocation12 [shape = 's32[2]{0}', space=sflag, size = 0x8, scoped, tag = 'scoped memory for tpu_custom_call.1']
    #allocation13 [shape = 'u8[32768]{0}', space=vmem, size = 0x8000, scoped, tag = 'output window, operand 2']
    %15 = vsyncpa [#allocation3], 0
    %s16 = scalar_lea.sflag [#allocation3], 1
    %17 = vsyncpa %s16, 0
    %18 = vsyncpa [#allocation6], 0
    %19 = vsyncpa [#allocation9], 0
    %20 = vsyncpa [#allocation4], 0
    %s21 = scalar_lea.sflag [#allocation4], 1
    %22 = vsyncpa %s21, 0
    %23 = vsyncpa [#allocation12], 0
    %s24 = scalar_lea.sflag [#allocation12], 1
    %25 = vsyncpa %s24, 0
    loop: start=0, step=1, limit=4
    $region2: #{tpu_custom_call.1} parent=1 // loop_pre_header
      _
    $region3: #{tpu_custom_call.1} parent=1 // loop_header
      %s27 = sphi 0, %s31
      %p28 = scmp.ge.s32.totalorder %s27, 4
      %s34 = sphi 0, %s53
      %s35 = sphi 0, %s49
      %s36 = sphi 0, %s45
      %s37 = sphi 0, %s34
      %s38 = sphi 0, %s35
      %s39 = sphi 0, %s36
      %s40 = sphi 0, %s37
      %s41 = sphi 0, %s38
      %s42 = sphi 0, %s39
      %s58 = sphi 0, %s60
      %s61 = sphi 0, %s58
      %s62 = sphi 0, %s61
      %s78 = sphi 0, %s62
      %s84 = sphi 0, %s86
      %s87 = sphi 0, %s84
      %s88 = sphi 0, %s87
      %s104 = sphi 0, %s88
      %s110 = sphi 0, %s112
      %s113 = sphi 0, %s110
      %s114 = sphi 0, %s113
      %s130 = sphi 0, %s114
      %s136 = sphi 0, %s138
      %s139 = sphi 0, %s136
      %s140 = sphi 0, %s139
      %s156 = sphi 0, %s140
      %s162 = sphi 0, %s164
      %s165 = sphi 0, %s162
      %s166 = sphi 0, %s165
      %s182 = sphi 0, %s166
      %s188 = sphi 0, %s190
      %s191 = sphi 0, %s188
      %s192 = sphi 0, %s191
      %s208 = sphi 0, %s192
      %s214 = sphi 0, %s216
      %s217 = sphi 0, %s214
      %s218 = sphi 0, %s217
      %s234 = sphi 0, %s218
      %s244 = sphi 0, %s246
      %s247 = sphi 0, %s244
      %s248 = sphi 0, %s247
      %s264 = sphi 0, %s248
      %s274 = sphi 0, %s276
      %s277 = sphi 0, %s274
      %s278 = sphi 0, %s277
      %s294 = sphi 0, %s278
      %s304 = sphi 0, %s306
      %s307 = sphi 0, %s304
      %s308 = sphi 0, %s307
      %s324 = sphi 0, %s308
    $region4: #{tpu_custom_call.1} parent=1 // loop_header_branch
      %30 = sbr.rel (%p28) target = $region8
    $region5: #{tpu_custom_call.1} parent=1 // loop_body
      %s32 = ssub.s32 %s27, 1
      %s33 = ssub.s32 %s27, 2
      %s43 = sadd.s32 1, %s36
      %p44 = scmp.ge.s32.totalorder %s43, 1
      %s45 = scalar_select %p44, 0, %s43
      %s46 = sadd.s32 1, %s35
      %s47 = scalar_select %p44, %s46, %s35
      %p48 = scmp.ge.s32.totalorder %s47, 1
      %s49 = scalar_select %p48, 0, %s47
      %s50 = sadd.s32 1, %s34
      %s51 = scalar_select %p48, %s50, %s34
      %p52 = scmp.ge.s32.totalorder %s51, 2
      %s53 = scalar_select %p52, 0, %s51
      %s54 = ssub.s32 %s34, %s53
      %s55 = ssub.s32 %s35, %s49
      %s56 = sor.u32 %s54, %s55
      %p57 = scmp.eq.s32.totalorder %s56, 0
      %s59 = sadd.s32 %s58, 1
      %s60 = scalar_select %p57, %s58, %s59
      %p63 = pneg %p57
      %p64 = scmp.eq.s32.totalorder %s27, 1
      %p65 = por %p63, %p64
      %p66 = scmp.ne.s32.totalorder %s58, %s61
      %p67 = scmp.eq.s32.totalorder %s27, 0
      %p68 = por %p66, %p67
      %p69 = scmp.ne.s32.totalorder %s58, %s61
      %p70 = scmp.eq.s32.totalorder %s32, 1
      %p71 = por %p69, %p70
      %p72 = scmp.ne.s32.totalorder %s61, %s62
      %p73 = scmp.eq.s32.totalorder %s32, 0
      %p74 = por %p72, %p73
      %p75 = scmp.ne.s32.totalorder %s61, %s62
      %p76 = scmp.eq.s32.totalorder %s33, 1
      %p77 = por %p75, %p76
      %p79 = scmp.ne.s32.totalorder %s62, %s78
      %p80 = scmp.eq.s32.totalorder %s33, 0
      %p81 = por %p79, %p80
      %s82 = ssub.s32 %s36, %s45
      %p83 = scmp.eq.s32.totalorder %s82, 0
      %s85 = sadd.s32 %s84, 1
      %s86 = scalar_select %p83, %s84, %s85
      %p89 = pneg %p83
      %p90 = scmp.eq.s32.totalorder %s27, 1
      %p91 = por %p89, %p90
      %p92 = scmp.ne.s32.totalorder %s84, %s87
      %p93 = scmp.eq.s32.totalorder %s27, 0
      %p94 = por %p92, %p93
      %p95 = scmp.ne.s32.totalorder %s84, %s87
      %p96 = scmp.eq.s32.totalorder %s32, 1
      %p97 = por %p95, %p96
      %p98 = scmp.ne.s32.totalorder %s87, %s88
      %p99 = scmp.eq.s32.totalorder %s32, 0
      %p100 = por %p98, %p99
      %p101 = scmp.ne.s32.totalorder %s87, %s88
      %p102 = scmp.eq.s32.totalorder %s33, 1
      %p103 = por %p101, %p102
      %p105 = scmp.ne.s32.totalorder %s88, %s104
      %p106 = scmp.eq.s32.totalorder %s33, 0
      %p107 = por %p105, %p106
      %s108 = ssub.s32 %s36, %s45
      %p109 = scmp.eq.s32.totalorder %s108, 0
      %s111 = sadd.s32 %s110, 1
      %s112 = scalar_select %p109, %s110, %s111
      %p115 = pneg %p109
      %p116 = scmp.eq.s32.totalorder %s27, 1
      %p117 = por %p115, %p116
      %p118 = scmp.ne.s32.totalorder %s110, %s113
      %p119 = scmp.eq.s32.totalorder %s27, 0
      %p120 = por %p118, %p119
      %p121 = scmp.ne.s32.totalorder %s110, %s113
      %p122 = scmp.eq.s32.totalorder %s32, 1
      %p123 = por %p121, %p122
      %p124 = scmp.ne.s32.totalorder %s113, %s114
      %p125 = scmp.eq.s32.totalorder %s32, 0
      %p126 = por %p124, %p125
      %p127 = scmp.ne.s32.totalorder %s113, %s114
      %p128 = scmp.eq.s32.totalorder %s33, 1
      %p129 = por %p127, %p128
      %p131 = scmp.ne.s32.totalorder %s114, %s130
      %p132 = scmp.eq.s32.totalorder %s33, 0
      %p133 = por %p131, %p132
      %s134 = ssub.s32 %s36, %s45
      %p135 = scmp.eq.s32.totalorder %s134, 0
      %s137 = sadd.s32 %s136, 1
      %s138 = scalar_select %p135, %s136, %s137
      %p141 = pneg %p135
      %p142 = scmp.eq.s32.totalorder %s27, 1
      %p143 = por %p141, %p142
      %p144 = scmp.ne.s32.totalorder %s136, %s139
      %p145 = scmp.eq.s32.totalorder %s27, 0
      %p146 = por %p144, %p145
      %p147 = scmp.ne.s32.totalorder %s136, %s139
      %p148 = scmp.eq.s32.totalorder %s32, 1
      %p149 = por %p147, %p148
      %p150 = scmp.ne.s32.totalorder %s139, %s140
      %p151 = scmp.eq.s32.totalorder %s32, 0
      %p152 = por %p150, %p151
      %p153 = scmp.ne.s32.totalorder %s139, %s140
      %p154 = scmp.eq.s32.totalorder %s33, 1
      %p155 = por %p153, %p154
      %p157 = scmp.ne.s32.totalorder %s140, %s156
      %p158 = scmp.eq.s32.totalorder %s33, 0
      %p159 = por %p157, %p158
      %s160 = ssub.s32 %s36, %s45
      %p161 = scmp.eq.s32.totalorder %s160, 0
      %s163 = sadd.s32 %s162, 1
      %s164 = scalar_select %p161, %s162, %s163
      %p167 = pneg %p161
      %p168 = scmp.eq.s32.totalorder %s27, 1
      %p169 = por %p167, %p168
      %p170 = scmp.ne.s32.totalorder %s162, %s165
      %p171 = scmp.eq.s32.totalorder %s27, 0
      %p172 = por %p170, %p171
      %p173 = scmp.ne.s32.totalorder %s162, %s165
      %p174 = scmp.eq.s32.totalorder %s32, 1
      %p175 = por %p173, %p174
      %p176 = scmp.ne.s32.totalorder %s165, %s166
      %p177 = scmp.eq.s32.totalorder %s32, 0
      %p178 = por %p176, %p177
      %p179 = scmp.ne.s32.totalorder %s165, %s166
      %p180 = scmp.eq.s32.totalorder %s33, 1
      %p181 = por %p179, %p180
      %p183 = scmp.ne.s32.totalorder %s166, %s182
      %p184 = scmp.eq.s32.totalorder %s33, 0
      %p185 = por %p183, %p184
      %s186 = ssub.s32 %s36, %s45
      %p187 = scmp.eq.s32.totalorder %s186, 0
      %s189 = sadd.s32 %s188, 1
      %s190 = scalar_select %p187, %s188, %s189
      %p193 = pneg %p187
      %p194 = scmp.eq.s32.totalorder %s27, 1
      %p195 = por %p193, %p194
      %p196 = scmp.ne.s32.totalorder %s188, %s191
      %p197 = scmp.eq.s32.totalorder %s27, 0
      %p198 = por %p196, %p197
      %p199 = scmp.ne.s32.totalorder %s188, %s191
      %p200 = scmp.eq.s32.totalorder %s32, 1
      %p201 = por %p199, %p200
      %p202 = scmp.ne.s32.totalorder %s191, %s192
      %p203 = scmp.eq.s32.totalorder %s32, 0
      %p204 = por %p202, %p203
      %p205 = scmp.ne.s32.totalorder %s191, %s192
      %p206 = scmp.eq.s32.totalorder %s33, 1
      %p207 = por %p205, %p206
      %p209 = scmp.ne.s32.totalorder %s192, %s208
      %p210 = scmp.eq.s32.totalorder %s33, 0
      %p211 = por %p209, %p210
      %s212 = ssub.s32 %s36, %s45
      %p213 = scmp.eq.s32.totalorder %s212, 0
      %s215 = sadd.s32 %s214, 1
      %s216 = scalar_select %p213, %s214, %s215
      %p219 = pneg %p213
      %p220 = scmp.eq.s32.totalorder %s27, 1
      %p221 = por %p219, %p220
      %p222 = scmp.ne.s32.totalorder %s214, %s217
      %p223 = scmp.eq.s32.totalorder %s27, 0
      %p224 = por %p222, %p223
      %p225 = scmp.ne.s32.totalorder %s214, %s217
      %p226 = scmp.eq.s32.totalorder %s32, 1
      %p227 = por %p225, %p226
      %p228 = scmp.ne.s32.totalorder %s217, %s218
      %p229 = scmp.eq.s32.totalorder %s32, 0
      %p230 = por %p228, %p229
      %p231 = scmp.ne.s32.totalorder %s217, %s218
      %p232 = scmp.eq.s32.totalorder %s33, 1
      %p233 = por %p231, %p232
      %p235 = scmp.ne.s32.totalorder %s218, %s234
      %p236 = scmp.eq.s32.totalorder %s33, 0
      %p237 = por %p235, %p236
      %s238 = ssub.s32 %s34, %s53
      %s239 = ssub.s32 %s36, %s45
      %s240 = sor.u32 %s238, %s239
      %s241 = ssub.s32 %s35, %s49
      %s242 = sor.u32 %s240, %s241
      %p243 = scmp.eq.s32.totalorder %s242, 0
      %s245 = sadd.s32 %s244, 1
      %s246 = scalar_select %p243, %s244, %s245
      %p249 = pneg %p243
      %p250 = scmp.eq.s32.totalorder %s27, 1
      %p251 = por %p249, %p250
      %p252 = scmp.ne.s32.totalorder %s244, %s247
      %p253 = scmp.eq.s32.totalorder %s27, 0
      %p254 = por %p252, %p253
      %p255 = scmp.ne.s32.totalorder %s244, %s247
      %p256 = scmp.eq.s32.totalorder %s32, 1
      %p257 = por %p255, %p256
      %p258 = scmp.ne.s32.totalorder %s247, %s248
      %p259 = scmp.eq.s32.totalorder %s32, 0
      %p260 = por %p258, %p259
      %p261 = scmp.ne.s32.totalorder %s247, %s248
      %p262 = scmp.eq.s32.totalorder %s33, 1
      %p263 = por %p261, %p262
      %p265 = scmp.ne.s32.totalorder %s248, %s264
      %p266 = scmp.eq.s32.totalorder %s33, 0
      %p267 = por %p265, %p266
      %s268 = ssub.s32 %s34, %s53
      %s269 = ssub.s32 %s36, %s45
      %s270 = sor.u32 %s268, %s269
      %s271 = ssub.s32 %s35, %s49
      %s272 = sor.u32 %s270, %s271
      %p273 = scmp.eq.s32.totalorder %s272, 0
      %s275 = sadd.s32 %s274, 1
      %s276 = scalar_select %p273, %s274, %s275
      %p279 = pneg %p273
      %p280 = scmp.eq.s32.totalorder %s27, 1
      %p281 = por %p279, %p280
      %p282 = scmp.ne.s32.totalorder %s274, %s277
      %p283 = scmp.eq.s32.totalorder %s27, 0
      %p284 = por %p282, %p283
      %p285 = scmp.ne.s32.totalorder %s274, %s277
      %p286 = scmp.eq.s32.totalorder %s32, 1
      %p287 = por %p285, %p286
      %p288 = scmp.ne.s32.totalorder %s277, %s278
      %p289 = scmp.eq.s32.totalorder %s32, 0
      %p290 = por %p288, %p289
      %p291 = scmp.ne.s32.totalorder %s277, %s278
      %p292 = scmp.eq.s32.totalorder %s33, 1
      %p293 = por %p291, %p292
      %p295 = scmp.ne.s32.totalorder %s278, %s294
      %p296 = scmp.eq.s32.totalorder %s33, 0
      %p297 = por %p295, %p296
      %s298 = ssub.s32 %s34, %s53
      %s299 = ssub.s32 %s36, %s45
      %s300 = sor.u32 %s298, %s299
      %s301 = ssub.s32 %s35, %s49
      %s302 = sor.u32 %s300, %s301
      %p303 = scmp.eq.s32.totalorder %s302, 0
      %s305 = sadd.s32 %s304, 1
      %s306 = scalar_select %p303, %s304, %s305
      %p309 = pneg %p303
      %p310 = scmp.eq.s32.totalorder %s27, 1
      %p311 = por %p309, %p310
      %p312 = scmp.ne.s32.totalorder %s304, %s307
      %p313 = scmp.eq.s32.totalorder %s27, 0
      %p314 = por %p312, %p313
      %p315 = scmp.ne.s32.totalorder %s304, %s307
      %p316 = scmp.eq.s32.totalorder %s32, 1
      %p317 = por %p315, %p316
      %p318 = scmp.ne.s32.totalorder %s307, %s308
      %p319 = scmp.eq.s32.totalorder %s32, 0
      %p320 = por %p318, %p319
      %p321 = scmp.ne.s32.totalorder %s307, %s308
      %p322 = scmp.eq.s32.totalorder %s33, 1
      %p323 = por %p321, %p322
      %p325 = scmp.ne.s32.totalorder %s308, %s324
      %p326 = scmp.eq.s32.totalorder %s33, 0
      %p327 = por %p325, %p326
      %p328 = scmp.le.s32.totalorder 1, %s27
      %p329 = scmp.lt.s32.totalorder %s27, 3
      %p330 = pnand %p328, %p329
      %p331 = pneg %p330
      // Predicated region
      $region9: #{tpu_custom_call.1} parent=5 // pred_check
        _
      $region10: #{tpu_custom_call.1} parent=5 // pred_check_branch
        %333 = sbr.rel (%p330) target = $region12
      $region11: #{tpu_custom_call.1} parent=5 // pred_region
        %s334 = ssub.s32 %s27, 1
        // Predicated region
        $region13: #{tpu_custom_call.1} parent=11 // pred_check
          %p335 = pneg %p100
        $region14: #{tpu_custom_call.1} parent=11 // pred_check_branch
          %337 = sbr.rel (%p335) target = $region16
        $region15: #{tpu_custom_call.1} parent=11 // pred_region
          %s339 = ssub.s32 512, 512
          %340 = vsyncadd [#allocation6], %s339
          %s341 = smul.addr %s39, 128
          %s342 = scalar_lea.hbm %s1, %s341
          %s343 = sshll.u32 [#allocation5], 4
          %s344 = int_to_ptr.vmem [resolvable:$true] %s343
          %349 = dma.hbm_to_vmem [thread:$0]  %s342, 512, %s344, [#allocation6], 128, 128, 8
        $region16: #{tpu_custom_call.1} parent=11 // pred_fallthru
          _
        // Predicated region
        $region17: #{tpu_custom_call.1} parent=11 // pred_check
          %p350 = pneg %p126
        $region18: #{tpu_custom_call.1} parent=11 // pred_check_branch
          %352 = sbr.rel (%p350) target = $region20
        $region19: #{tpu_custom_call.1} parent=11 // pred_region
          %s354 = ssub.s32 512, 512
          %355 = vsyncadd [#allocation6], %s354
          %s356 = smul.addr %s39, 128
          %s357 = scalar_lea.hbm %s2, %s356
          %s358 = sshll.u32 [#allocation7], 4
          %s359 = int_to_ptr.vmem [resolvable:$true] %s358
          %364 = dma.hbm_to_vmem [thread:$0]  %s357, 512, %s359, [#allocation6], 128, 128, 8
        $region20: #{tpu_custom_call.1} parent=11 // pred_fallthru
          _
        // Predicated region
        $region21: #{tpu_custom_call.1} parent=11 // pred_check
          %p365 = pneg %p152
        $region22: #{tpu_custom_call.1} parent=11 // pred_check_branch
          %367 = sbr.rel (%p365) target = $region24
        $region23: #{tpu_custom_call.1} parent=11 // pred_region
          %s369 = ssub.s32 512, 512
          %370 = vsyncadd [#allocation9], %s369
          %s371 = smul.addr %s39, 128
          %s372 = scalar_lea.hbm %s3, %s371
          %s373 = sshll.u32 [#allocation8], 4
          %s374 = int_to_ptr.vmem [resolvable:$true] %s373
          %379 = dma.hbm_to_vmem [thread:$0]  %s372, 512, %s374, [#allocation9], 128, 128, 8
        $region24: #{tpu_custom_call.1} parent=11 // pred_fallthru
          _
        // Predicated region
        $region25: #{tpu_custom_call.1} parent=11 // pred_check
          %p380 = pneg %p178
        $region26: #{tpu_custom_call.1} parent=11 // pred_check_branch
          %382 = sbr.rel (%p380) target = $region28
        $region27: #{tpu_custom_call.1} parent=11 // pred_region
          %p383 = scmp.lt.s32.totalorder %s39, 0
          %s384 = scalar_select %p383, %s39, 0
          %s385 = scalar_lea.vmem %s4, %s384
        $region28: #{tpu_custom_call.1} parent=11 // pred_fallthru
          _
        // Predicated region
        $region29: #{tpu_custom_call.1} parent=11 // pred_check
          %p386 = pneg %p204
        $region30: #{tpu_custom_call.1} parent=11 // pred_check_branch
          %388 = sbr.rel (%p386) target = $region32
        $region31: #{tpu_custom_call.1} parent=11 // pred_region
          %p389 = scmp.lt.s32.totalorder %s39, 0
          %s390 = scalar_select %p389, %s39, 0
          %s391 = scalar_lea.vmem %s5, %s390
        $region32: #{tpu_custom_call.1} parent=11 // pred_fallthru
          _
        // Predicated region
        $region33: #{tpu_custom_call.1} parent=11 // pred_check
          %p392 = pneg %p230
        $region34: #{tpu_custom_call.1} parent=11 // pred_check_branch
          %394 = sbr.rel (%p392) target = $region36
        $region35: #{tpu_custom_call.1} parent=11 // pred_region
          %p395 = scmp.lt.s32.totalorder %s39, 0
          %s396 = scalar_select %p395, %s39, 0
          %s397 = scalar_lea.vmem %s6, %s396
        $region36: #{tpu_custom_call.1} parent=11 // pred_fallthru
          _
      $region12: #{tpu_custom_call.1} parent=5 // pred_fallthru
        _
      %p398 = scmp.lt.s32.totalorder %s27, 2
      // Predicated region
      $region37: #{tpu_custom_call.1} parent=5 // pred_check
        %p399 = pneg %p398
      $region38: #{tpu_custom_call.1} parent=5 // pred_check_branch
        %401 = sbr.rel (%p399) target = $region40
      $region39: #{tpu_custom_call.1} parent=5 // pred_region
        // Predicated region
        $region41: #{tpu_custom_call.1} parent=39 // pred_check
          %p402 = pneg %p68
        $region42: #{tpu_custom_call.1} parent=39 // pred_check_branch
          %404 = sbr.rel (%p402) target = $region44
        $region43: #{tpu_custom_call.1} parent=39 // pred_region
          %s405 = sand.u32 %s58, 1
          %s406 = scalar_lea.sflag [#allocation3], %s405
          %s407 = sand.u32 %s58, 1
          %s408 = smul.addr %s407, 8
          %s409 = scalar_lea.vmem [#allocation2], %s408
          %s411 = ssub.s32 128, 128
          %412 = vsyncadd %s406, %s411
          %s413 = sadd.s32 %s35, %s34
          %s414 = smul.addr %s413, 128
          %s415 = scalar_lea.hbm %s0, %s414
          %s417 = sshll.u32 %s409, 4
          %s418 = int_to_ptr.vmem [resolvable:$true] %s417
          %420 = dma.hbm_to_vmem [thread:$0]  %s415, 128, %s418, %s406
        $region44: #{tpu_custom_call.1} parent=39 // pred_fallthru
          _
      $region40: #{tpu_custom_call.1} parent=5 // pred_fallthru
        _
      %p421 = scmp.le.s32.totalorder 1, %s27
      %p422 = scmp.lt.s32.totalorder %s27, 3
      %p423 = pnand %p421, %p422
      %p424 = pneg %p423
      // Predicated region
      $region45: #{tpu_custom_call.1} parent=5 // pred_check
        _
      $region46: #{tpu_custom_call.1} parent=5 // pred_check_branch
        %426 = sbr.rel (%p423) target = $region48
      $region47: #{tpu_custom_call.1} parent=5 // pred_region
        %s427 = ssub.s32 %s27, 1
        %s428 = sand.u32 %s61, 1
        %s429 = scalar_lea.sflag [#allocation3], %s428
        %s430 = sand.u32 %s61, 1
        %s431 = smul.addr %s430, 8
        %s432 = scalar_lea.vmem [#allocation2], %s431
        // Predicated region
        $region49: #{tpu_custom_call.1} parent=47 // pred_check
          %p433 = pneg %p74
        $region50: #{tpu_custom_call.1} parent=47 // pred_check_branch
          %435 = sbr.rel (%p433) target = $region52
        $region51: #{tpu_custom_call.1} parent=47 // pred_region
          %436 = dma.done %s429, 128
        $region52: #{tpu_custom_call.1} parent=47 // pred_fallthru
          _
        // Predicated region
        $region53: #{tpu_custom_call.1} parent=47 // pred_check
          %p437 = pneg %p100
        $region54: #{tpu_custom_call.1} parent=47 // pred_check_branch
          %439 = sbr.rel (%p437) target = $region56
        $region55: #{tpu_custom_call.1} parent=47 // pred_region
          %440 = dma.done [#allocation6], 512
        $region56: #{tpu_custom_call.1} parent=47 // pred_fallthru
          _
        // Predicated region
        $region57: #{tpu_custom_call.1} parent=47 // pred_check
          %p441 = pneg %p126
        $region58: #{tpu_custom_call.1} parent=47 // pred_check_branch
          %443 = sbr.rel (%p441) target = $region60
        $region59: #{tpu_custom_call.1} parent=47 // pred_region
          %444 = dma.done [#allocation6], 512
        $region60: #{tpu_custom_call.1} parent=47 // pred_fallthru
          _
        // Predicated region
        $region61: #{tpu_custom_call.1} parent=47 // pred_check
          %p445 = pneg %p152
        $region62: #{tpu_custom_call.1} parent=47 // pred_check_branch
          %447 = sbr.rel (%p445) target = $region64
        $region63: #{tpu_custom_call.1} parent=47 // pred_region
          %448 = dma.done [#allocation9], 512
        $region64: #{tpu_custom_call.1} parent=47 // pred_fallthru
          _
        %s449 = sand.u32 %s61, 1
        %s450 = scalar_lea.sflag [#allocation3], %s449
        %s451 = sand.u32 %s61, 1
        %s452 = smul.addr %s451, 8
        %s453 = scalar_lea.vmem [#allocation2], %s452
        %p454 = pneg %p74
        %p455 = pneg %p71
        %p456 = pneg %p100
        %p457 = pneg %p97
        %p458 = pneg %p126
        %p459 = pneg %p123
        %p460 = pneg %p152
        %p461 = pneg %p149
        %p462 = scmp.lt.s32.totalorder %s39, 0
        %s463 = scalar_select %p462, %s39, 0
        %s464 = scalar_lea.vmem %s4, %s463
        %p465 = pneg %p178
        %p466 = pneg %p175
        %p467 = scmp.lt.s32.totalorder %s39, 0
        %s468 = scalar_select %p467, %s39, 0
        %s469 = scalar_lea.vmem %s5, %s468
        %p470 = pneg %p204
        %p471 = pneg %p201
        %p472 = scmp.lt.s32.totalorder %s39, 0
        %s473 = scalar_select %p472, %s39, 0
        %s474 = scalar_lea.vmem %s6, %s473
        %p475 = pneg %p230
        %p476 = pneg %p227
        %p477 = pneg %p260
        %p478 = pneg %p257
        %s479 = sand.u32 %s247, 1
        %s480 = scalar_lea.sflag [#allocation4], %s479
        %s481 = sand.u32 %s247, 1
        %s482 = smul.addr %s481, 32
        %s483 = scalar_lea.vmem [#allocation10], %s482
        %p484 = pneg %p290
        %p485 = pneg %p287
        %s486 = sand.u32 %s32, 1
        %s487 = scalar_lea.sflag [#allocation12], %s486
        %s488 = sand.u32 %s277, 1
        %s489 = smul.addr %s488, 32
        %s490 = scalar_lea.vmem [#allocation11], %s489
        %p491 = pneg %p320
        %p492 = pneg %p317
        %s493 = sand.u32 %s32, 1
        %s494 = scalar_lea.sflag [#allocation12], %s493
        %s495 = sand.u32 %s307, 1
        %s496 = smul.addr %s495, 32
        %s497 = scalar_lea.vmem [#allocation13], %s496
        %p498 = scmp.lt.s32.totalorder %s39, 0
        %s499 = scalar_select %p498, %s39, 0
        %s500 = scalar_lea.vmem %s4, %s499
        %p501 = scmp.lt.s32.totalorder %s39, 0
        %s502 = scalar_select %p501, %s39, 0
        %s503 = scalar_lea.vmem %s5, %s502
        %p504 = scmp.lt.s32.totalorder %s39, 0
        %s505 = scalar_select %p504, %s39, 0
        %s506 = scalar_lea.vmem %s6, %s505
        %s507 = smul.u32 4, %s39
        %s508 = smul.u32 4, %s39
        %s509 = smul.u32 4, %s39
        %v510 = vld [vmem:[%s432] sm:$0xff]
        %v511 = vld [vmem:[#allocation5] sm:$0xff]
        %v512 = vld [vmem:[#allocation5 + $0x8] sm:$0xff]
        %v513 = vld [vmem:[#allocation5 + $0x10] sm:$0xff]
        %v514 = vld [vmem:[#allocation5 + $0x18] sm:$0xff]
        %v515 = vld [vmem:[%s500] sm:$0x1]
        %v517 = vlaneseq
        %v518 = vshrl.u32 %v517, 7
        %v519 = vsub.s32 0, %v518
        %v520 = vrot.slane %v515, %v519
        %vm522 = vcmask 261120
        %v524 = vsel %vm522, %v510, 0
        %526 = vmatprep.subr.mxu0 0.0
        %527 = vmatpush1.msra.mxu0 0.0
        %528 = vmatprep.subr.mxu0 0.0
        %529 = vmatpush1.msra.mxu0 0.0
        %530 = vmatprep.subr.mxu0 0.0
        %531 = vmatpush1.msra.mxu0 0.0
        %532 = vmatprep.subr.mxu0 0.0
        %533 = vmatpush1.msra.mxu0 0.0
        %534 = vmatprep.subr.mxu0 0.0
        %535 = vmatpush1.msra.mxu0 0.0
        %536 = vmatprep.subr.mxu0 0.0
        %537 = vmatpush1.msra.mxu0 0.0
        %538 = vmatprep.subr.mxu0 0.0
        %539 = vmatpush1.msra.mxu0 0.0
        %540 = vmatprep.subr.mxu0 0.0
        %541 = vmatpush1.msra.mxu0 0.0
        %542 = vmatprep.subr.mxu0 0.0
        %543 = vmatpush1.msra.mxu0 0.0
        %544 = vmatprep.subr.mxu0 0.0
        %545 = vmatpush1.msra.mxu0 0.0
        %546 = vmatprep.subr.mxu0 0.0
        %547 = vmatpush1.msra.mxu0 0.0
        %548 = vmatprep.subr.mxu0 0.0
        %549 = vmatpush1.msra.mxu0 0.0
        %550 = vmatprep.subr.mxu0 0.0
        %551 = vmatpush1.msra.mxu0 %v514
        %552 = vmatprep.subr.mxu0 0.0
        %553 = vmatpush1.msra.mxu0 %v513
        %554 = vmatprep.subr.mxu0 0.0
        %555 = vmatpush1.msra.mxu0 %v512
        %556 = vmatprep.subr.mxu0 0.0
        %557 = vmatpush1.msra.mxu0 %v511
        %558 = vmatprep.subr.mxu0 0.0
        %559 = vmatpush2.msra.mxu0 0.0
        %560 = vmatprep.subr.mxu0 0.0
        %561 = vmatpush2.msra.mxu0 0.0
        %562 = vmatprep.subr.mxu0 0.0
        %563 = vmatpush2.msra.mxu0 0.0
        %564 = vmatprep.subr.mxu0 0.0
        %565 = vmatpush2.msra.mxu0 0.0
        %566 = vmatprep.subr.mxu0 0.0
        %567 = vmatpush2.msra.mxu0 0.0
        %568 = vmatprep.subr.mxu0 0.0
        %569 = vmatpush2.msra.mxu0 0.0
        %570 = vmatprep.subr.mxu0 0.0
        %571 = vmatpush2.msra.mxu0 0.0
        %572 = vmatprep.subr.mxu0 0.0
        %573 = vmatpush2.msra.mxu0 0.0
        %574 = vmatprep.subr.mxu0 0.0
        %575 = vmatpush2.msra.mxu0 0.0
        %576 = vmatprep.subr.mxu0 0.0
        %577 = vmatpush2.msra.mxu0 0.0
        %578 = vmatprep.subr.mxu0 0.0
        %579 = vmatpush2.msra.mxu0 0.0
        %580 = vmatprep.subr.mxu0 0.0
        %581 = vmatpush2.msra.mxu0 0.0
        %582 = vmatprep.subr.mxu0 0.0
        %583 = vmatpush2.msra.mxu0 0.0
        %584 = vmatprep.subr.mxu0 0.0
        %585 = vmatpush2.msra.mxu0 0.0
        %586 = vmatprep.subr.mxu0 0.0
        %587 = vmatpush2.msra.mxu0 0.0
        %588 = vmatprep.subr.mxu0 0.0
        %589 = vmatpush2.msra.mxu0 0.0
        %590 = vmatprep.mubr.f32.mxu0 0.0
        %591 = vmatmul.mubr.f32.gmra.mxu0 %v524
        %v592 = vpop.f32.mrf.mxu0
        %v593 = vadd.f32 %v520, %v592
        %v594 = vpop.f32.mrf.mxu0
        %595 = vdwg.mxu0
        %vm596 = vcmask 64512
        %597 = vst.msk [vmem:[%s483] sm:$0xff] %vm596, %v593
        %599 = vrot.lane.b32.xlu0 %v593, 120
        %v600 = vpop.permute.xlu0 %599
        %s602 = scalar_lea.vmem %s483, 8 [#allocation10]
        %603 = vst.msk [vmem:[%s602] sm:$0xff] %vm596, %v600
        %604 = vrot.lane.b32.xlu0 %v593, 112
        %v605 = vpop.permute.xlu0 %604
        %s607 = scalar_lea.vmem %s483, 16 [#allocation10]
        %608 = vst.msk [vmem:[%s607] sm:$0xff] %vm596, %v605
        %609 = vrot.lane.b32.xlu0 %v593, 104
        %v610 = vpop.permute.xlu0 %609
        %s612 = scalar_lea.vmem %s483, 24 [#allocation10]
        %613 = vst.msk [vmem:[%s612] sm:$0xff] %vm596, %v610
        %v614 = vld [vmem:[#allocation7] sm:$0xff]
        %v615 = vld [vmem:[#allocation7 + $0x8] sm:$0xff]
        %v616 = vld [vmem:[#allocation7 + $0x10] sm:$0xff]
        %v617 = vld [vmem:[#allocation7 + $0x18] sm:$0xff]
        %v618 = vld [vmem:[%s503] sm:$0x1]
        %v620 = vlaneseq
        %v621 = vshrl.u32 %v620, 7
        %v622 = vsub.s32 0, %v621
        %v623 = vrot.slane %v618, %v622
        %625 = vmatprep.subr.mxu0 0.0
        %626 = vmatpush1.msra.mxu0 0.0
        %627 = vmatprep.subr.mxu0 0.0
        %628 = vmatpush1.msra.mxu0 0.0
        %629 = vmatprep.subr.mxu0 0.0
        %630 = vmatpush1.msra.mxu0 0.0
        %631 = vmatprep.subr.mxu0 0.0
        %632 = vmatpush1.msra.mxu0 0.0
        %633 = vmatprep.subr.mxu0 0.0
        %634 = vmatpush1.msra.mxu0 0.0
        %635 = vmatprep.subr.mxu0 0.0
        %636 = vmatpush1.msra.mxu0 0.0
        %637 = vmatprep.subr.mxu0 0.0
        %638 = vmatpush1.msra.mxu0 0.0
        %639 = vmatprep.subr.mxu0 0.0
        %640 = vmatpush1.msra.mxu0 0.0
        %641 = vmatprep.subr.mxu0 0.0
        %642 = vmatpush1.msra.mxu0 0.0
        %643 = vmatprep.subr.mxu0 0.0
        %644 = vmatpush1.msra.mxu0 0.0
        %645 = vmatprep.subr.mxu0 0.0
        %646 = vmatpush1.msra.mxu0 0.0
        %647 = vmatprep.subr.mxu0 0.0
        %648 = vmatpush1.msra.mxu0 0.0
        %649 = vmatprep.subr.mxu0 0.0
        %650 = vmatpush1.msra.mxu0 %v617
        %651 = vmatprep.subr.mxu0 0.0
        %652 = vmatpush1.msra.mxu0 %v616
        %653 = vmatprep.subr.mxu0 0.0
        %654 = vmatpush1.msra.mxu0 %v615
        %655 = vmatprep.subr.mxu0 0.0
        %656 = vmatpush1.msra.mxu0 %v614
        %657 = vmatprep.subr.mxu0 0.0
        %658 = vmatpush2.msra.mxu0 0.0
        %659 = vmatprep.subr.mxu0 0.0
        %660 = vmatpush2.msra.mxu0 0.0
        %661 = vmatprep.subr.mxu0 0.0
        %662 = vmatpush2.msra.mxu0 0.0
        %663 = vmatprep.subr.mxu0 0.0
        %664 = vmatpush2.msra.mxu0 0.0
        %665 = vmatprep.subr.mxu0 0.0
        %666 = vmatpush2.msra.mxu0 0.0
        %667 = vmatprep.subr.mxu0 0.0
        %668 = vmatpush2.msra.mxu0 0.0
        %669 = vmatprep.subr.mxu0 0.0
        %670 = vmatpush2.msra.mxu0 0.0
        %671 = vmatprep.subr.mxu0 0.0
        %672 = vmatpush2.msra.mxu0 0.0
        %673 = vmatprep.subr.mxu0 0.0
        %674 = vmatpush2.msra.mxu0 0.0
        %675 = vmatprep.subr.mxu0 0.0
        %676 = vmatpush2.msra.mxu0 0.0
        %677 = vmatprep.subr.mxu0 0.0
        %678 = vmatpush2.msra.mxu0 0.0
        %679 = vmatprep.subr.mxu0 0.0
        %680 = vmatpush2.msra.mxu0 0.0
        %681 = vmatprep.subr.mxu0 0.0
        %682 = vmatpush2.msra.mxu0 0.0
        %683 = vmatprep.subr.mxu0 0.0
        %684 = vmatpush2.msra.mxu0 0.0
        %685 = vmatprep.subr.mxu0 0.0
        %686 = vmatpush2.msra.mxu0 0.0
        %687 = vmatprep.subr.mxu0 0.0
        %688 = vmatpush2.msra.mxu0 0.0
        %689 = vmatprep.mubr.f32.mxu0 0.0
        %690 = vmatmul.mubr.f32.gmra.mxu0 %v524
        %v691 = vpop.f32.mrf.mxu0
        %v692 = vadd.f32 %v623, %v691
        %v693 = vpop.f32.mrf.mxu0
        %694 = vdwg.mxu0
        %695 = vst.msk [vmem:[%s490] sm:$0xff] %vm596, %v692
        %697 = vrot.lane.b32.xlu0 %v692, 120
        %v698 = vpop.permute.xlu0 %697
        %s700 = scalar_lea.vmem %s490, 8 [#allocation11]
        %701 = vst.msk [vmem:[%s700] sm:$0xff] %vm596, %v698
        %702 = vrot.lane.b32.xlu0 %v692, 112
        %v703 = vpop.permute.xlu0 %702
        %s705 = scalar_lea.vmem %s490, 16 [#allocation11]
        %706 = vst.msk [vmem:[%s705] sm:$0xff] %vm596, %v703
        %707 = vrot.lane.b32.xlu0 %v692, 104
        %v708 = vpop.permute.xlu0 %707
        %s710 = scalar_lea.vmem %s490, 24 [#allocation11]
        %711 = vst.msk [vmem:[%s710] sm:$0xff] %vm596, %v708
        %v712 = vld [vmem:[#allocation8] sm:$0xff]
        %v713 = vld [vmem:[#allocation8 + $0x8] sm:$0xff]
        %v714 = vld [vmem:[#allocation8 + $0x10] sm:$0xff]
        %v715 = vld [vmem:[#allocation8 + $0x18] sm:$0xff]
        %v716 = vld [vmem:[%s506] sm:$0x1]
        %v718 = vlaneseq
        %v719 = vshrl.u32 %v718, 7
        %v720 = vsub.s32 0, %v719
        %v721 = vrot.slane %v716, %v720
        %723 = vmatprep.subr.mxu0 0.0
        %724 = vmatpush1.msra.mxu0 0.0
        %725 = vmatprep.subr.mxu0 0.0
        %726 = vmatpush1.msra.mxu0 0.0
        %727 = vmatprep.subr.mxu0 0.0
        %728 = vmatpush1.msra.mxu0 0.0
        %729 = vmatprep.subr.mxu0 0.0
        %730 = vmatpush1.msra.mxu0 0.0
        %731 = vmatprep.subr.mxu0 0.0
        %732 = vmatpush1.msra.mxu0 0.0
        %733 = vmatprep.subr.mxu0 0.0
        %734 = vmatpush1.msra.mxu0 0.0
        %735 = vmatprep.subr.mxu0 0.0
        %736 = vmatpush1.msra.mxu0 0.0
        %737 = vmatprep.subr.mxu0 0.0
        %738 = vmatpush1.msra.mxu0 0.0
        %739 = vmatprep.subr.mxu0 0.0
        %740 = vmatpush1.msra.mxu0 0.0
        %741 = vmatprep.subr.mxu0 0.0
        %742 = vmatpush1.msra.mxu0 0.0
        %743 = vmatprep.subr.mxu0 0.0
        %744 = vmatpush1.msra.mxu0 0.0
        %745 = vmatprep.subr.mxu0 0.0
        %746 = vmatpush1.msra.mxu0 0.0
        %747 = vmatprep.subr.mxu0 0.0
        %748 = vmatpush1.msra.mxu0 %v715
        %749 = vmatprep.subr.mxu0 0.0
        %750 = vmatpush1.msra.mxu0 %v714
        %751 = vmatprep.subr.mxu0 0.0
        %752 = vmatpush1.msra.mxu0 %v713
        %753 = vmatprep.subr.mxu0 0.0
        %754 = vmatpush1.msra.mxu0 %v712
        %755 = vmatprep.subr.mxu0 0.0
        %756 = vmatpush2.msra.mxu0 0.0
        %757 = vmatprep.subr.mxu0 0.0
        %758 = vmatpush2.msra.mxu0 0.0
        %759 = vmatprep.subr.mxu0 0.0
        %760 = vmatpush2.msra.mxu0 0.0
        %761 = vmatprep.subr.mxu0 0.0
        %762 = vmatpush2.msra.mxu0 0.0
        %763 = vmatprep.subr.mxu0 0.0
        %764 = vmatpush2.msra.mxu0 0.0
        %765 = vmatprep.subr.mxu0 0.0
        %766 = vmatpush2.msra.mxu0 0.0
        %767 = vmatprep.subr.mxu0 0.0
        %768 = vmatpush2.msra.mxu0 0.0
        %769 = vmatprep.subr.mxu0 0.0
        %770 = vmatpush2.msra.mxu0 0.0
        %771 = vmatprep.subr.mxu0 0.0
        %772 = vmatpush2.msra.mxu0 0.0
        %773 = vmatprep.subr.mxu0 0.0
        %774 = vmatpush2.msra.mxu0 0.0
        %775 = vmatprep.subr.mxu0 0.0
        %776 = vmatpush2.msra.mxu0 0.0
        %777 = vmatprep.subr.mxu0 0.0
        %778 = vmatpush2.msra.mxu0 0.0
        %779 = vmatprep.subr.mxu0 0.0
        %780 = vmatpush2.msra.mxu0 0.0
        %781 = vmatprep.subr.mxu0 0.0
        %782 = vmatpush2.msra.mxu0 0.0
        %783 = vmatprep.subr.mxu0 0.0
        %784 = vmatpush2.msra.mxu0 0.0
        %785 = vmatprep.subr.mxu0 0.0
        %786 = vmatpush2.msra.mxu0 0.0
        %787 = vmatprep.mubr.f32.mxu0 0.0
        %788 = vmatmul.mubr.f32.gmra.mxu0 %v524
        %v789 = vpop.f32.mrf.mxu0
        %v790 = vadd.f32 %v721, %v789
        %v791 = vpop.f32.mrf.mxu0
        %792 = vdwg.mxu0
        %793 = vst.msk [vmem:[%s497] sm:$0xff] %vm596, %v790
        %795 = vrot.lane.b32.xlu0 %v790, 120
        %v796 = vpop.permute.xlu0 %795
        %s798 = scalar_lea.vmem %s497, 8 [#allocation13]
        %799 = vst.msk [vmem:[%s798] sm:$0xff] %vm596, %v796
        %800 = vrot.lane.b32.xlu0 %v790, 112
        %v801 = vpop.permute.xlu0 %800
        %s803 = scalar_lea.vmem %s497, 16 [#allocation13]
        %804 = vst.msk [vmem:[%s803] sm:$0xff] %vm596, %v801
        %805 = vrot.lane.b32.xlu0 %v790, 104
        %v806 = vpop.permute.xlu0 %805
        %s808 = scalar_lea.vmem %s497, 24 [#allocation13]
        %809 = vst.msk [vmem:[%s808] sm:$0xff] %vm596, %v806
        %s810 = sand.u32 %s247, 1
        %s811 = scalar_lea.sflag [#allocation4], %s810
        %s812 = sand.u32 %s247, 1
        %s813 = smul.addr %s812, 32
        %s814 = scalar_lea.vmem [#allocation10], %s813
        %s815 = sand.u32 %s32, 1
        %s816 = scalar_lea.sflag [#allocation12], %s815
        %s817 = sand.u32 %s277, 1
        %s818 = smul.addr %s817, 32
        %s819 = scalar_lea.vmem [#allocation11], %s818
        %s820 = sand.u32 %s32, 1
        %s821 = scalar_lea.sflag [#allocation12], %s820
        %s822 = sand.u32 %s307, 1
        %s823 = smul.addr %s822, 32
        %s824 = scalar_lea.vmem [#allocation13], %s823
        // Predicated region
        $region65: #{tpu_custom_call.1} parent=47 // pred_check
          %p825 = pneg %p257
        $region66: #{tpu_custom_call.1} parent=47 // pred_check_branch
          %827 = sbr.rel (%p825) target = $region68
        $region67: #{tpu_custom_call.1} parent=47 // pred_region
          %s828 = smul.u32 4, %s39
          %s830 = ssub.s32 512, 512
          %831 = vsyncadd %s811, %s830
          %s832 = sadd.s32 %s38, %s828
          %s833 = smul.addr %s37, 4
          %s834 = sadd.s32 %s832, %s833
          %s835 = smul.addr %s834, 128
          %s836 = scalar_lea.hbm %s7, %s835
          %s837 = sshll.u32 %s814, 4
          %s838 = int_to_ptr.vmem [resolvable:$true] %s837
          %843 = dma.vmem_to_hbm [thread:$0]  %s838, 512, %s836, %s811, 128, 128, 8
        $region68: #{tpu_custom_call.1} parent=47 // pred_fallthru
          _
        // Predicated region
        $region69: #{tpu_custom_call.1} parent=47 // pred_check
          %p844 = pneg %p287
        $region70: #{tpu_custom_call.1} parent=47 // pred_check_branch
          %846 = sbr.rel (%p844) target = $region72
        $region71: #{tpu_custom_call.1} parent=47 // pred_region
          %s847 = smul.u32 4, %s39
          %s849 = ssub.s32 512, 512
          %850 = vsyncadd %s816, %s849
          %s851 = sadd.s32 %s38, %s847
          %s852 = smul.addr %s37, 4
          %s853 = sadd.s32 %s851, %s852
          %s854 = smul.addr %s853, 128
          %s855 = scalar_lea.hbm %s8, %s854
          %s856 = sshll.u32 %s819, 4
          %s857 = int_to_ptr.vmem [resolvable:$true] %s856
          %862 = dma.vmem_to_hbm [thread:$0]  %s857, 512, %s855, %s816, 128, 128, 8
        $region72: #{tpu_custom_call.1} parent=47 // pred_fallthru
          _
        // Predicated region
        $region73: #{tpu_custom_call.1} parent=47 // pred_check
          %p863 = pneg %p317
        $region74: #{tpu_custom_call.1} parent=47 // pred_check_branch
          %865 = sbr.rel (%p863) target = $region76
        $region75: #{tpu_custom_call.1} parent=47 // pred_region
          %s866 = smul.u32 4, %s39
          %s868 = ssub.s32 512, 512
          %869 = vsyncadd %s821, %s868
          %s870 = sadd.s32 %s38, %s866
          %s871 = smul.addr %s37, 4
          %s872 = sadd.s32 %s870, %s871
          %s873 = smul.addr %s872, 128
          %s874 = scalar_lea.hbm %s9, %s873
          %s875 = sshll.u32 %s824, 4
          %s876 = int_to_ptr.vmem [resolvable:$true] %s875
          %881 = dma.vmem_to_hbm [thread:$0]  %s876, 512, %s874, %s821, 128, 128, 8
        $region76: #{tpu_custom_call.1} parent=47 // pred_fallthru
          _
      $region48: #{tpu_custom_call.1} parent=5 // pred_fallthru
        _
      %p882 = scmp.le.s32.totalorder 2, %s27
      // Predicated region
      $region77: #{tpu_custom_call.1} parent=5 // pred_check
        %p883 = pneg %p882
      $region78: #{tpu_custom_call.1} parent=5 // pred_check_branch
        %885 = sbr.rel (%p883) target = $region80
      $region79: #{tpu_custom_call.1} parent=5 // pred_region
        %s886 = ssub.s32 %s27, 2
        // Predicated region
        $region81: #{tpu_custom_call.1} parent=79 // pred_check
          %p887 = pneg %p263
        $region82: #{tpu_custom_call.1} parent=79 // pred_check_branch
          %889 = sbr.rel (%p887) target = $region84
        $region83: #{tpu_custom_call.1} parent=79 // pred_region
          %s890 = sand.u32 %s248, 1
          %s891 = scalar_lea.sflag [#allocation4], %s890
          %s892 = sand.u32 %s248, 1
          %s893 = smul.addr %s892, 32
          %s894 = scalar_lea.vmem [#allocation10], %s893
          %895 = dma.done %s891, 512
        $region84: #{tpu_custom_call.1} parent=79 // pred_fallthru
          _
        // Predicated region
        $region85: #{tpu_custom_call.1} parent=79 // pred_check
          %p896 = pneg %p293
        $region86: #{tpu_custom_call.1} parent=79 // pred_check_branch
          %898 = sbr.rel (%p896) target = $region88
        $region87: #{tpu_custom_call.1} parent=79 // pred_region
          %s899 = sand.u32 %s33, 1
          %s900 = scalar_lea.sflag [#allocation12], %s899
          %s901 = sand.u32 %s278, 1
          %s902 = smul.addr %s901, 32
          %s903 = scalar_lea.vmem [#allocation11], %s902
          %904 = dma.done %s900, 512
        $region88: #{tpu_custom_call.1} parent=79 // pred_fallthru
          _
        // Predicated region
        $region89: #{tpu_custom_call.1} parent=79 // pred_check
          %p905 = pneg %p323
        $region90: #{tpu_custom_call.1} parent=79 // pred_check_branch
          %907 = sbr.rel (%p905) target = $region92
        $region91: #{tpu_custom_call.1} parent=79 // pred_region
          %s908 = sand.u32 %s33, 1
          %s909 = scalar_lea.sflag [#allocation12], %s908
          %s910 = sand.u32 %s308, 1
          %s911 = smul.addr %s910, 32
          %s912 = scalar_lea.vmem [#allocation13], %s911
          %913 = dma.done %s909, 512
        $region92: #{tpu_custom_call.1} parent=79 // pred_fallthru
          _
      $region80: #{tpu_custom_call.1} parent=5 // pred_fallthru
        _
    $region6: #{tpu_custom_call.1} parent=1 // loop_footer
      %s31 = sadd.s32 1, %s27
    $region7: #{tpu_custom_call.1} parent=1 // loop_footer_branch
      %26 = sbr.rel target = $region3
    $region8: #{tpu_custom_call.1} parent=1 // loop_exit
      _
    %914 = vsyncpa [#allocation3], 1
    %s915 = scalar_lea.sflag [#allocation3], 1
    %916 = vsyncpa %s915, 1
    %917 = vsyncpa [#allocation6], 1
    %918 = vsyncpa [#allocation9], 1
    %919 = vsyncpa [#allocation4], 1
    %s920 = scalar_lea.sflag [#allocation4], 1
    %921 = vsyncpa %s920, 1
    %922 = vsyncpa [#allocation12], 1
    %s923 = scalar_lea.sflag [#allocation12], 1
    %924 = vsyncpa %s923, 1

</llo_original>
